<compile_context>
chip_gen: v7x
topology: tpu7x:2x2x1
jax: 0.10.0
libtpu: 0.0.40
codegen_flags: <defaults>
</compile_context>

<pallas_src>
import jax
import jax.numpy as jnp
from jax.experimental import pallas as pl
from jax.experimental.pallas import tpu as pltpu


def _outconv_kernel(w_ref, b_ref, x_ref, o_ref, acc_ref):
    # w_ref: (Cout, tk)  b_ref: (Cout, 1)  x_ref: (tk, tm)  o_ref: (Cout, tm)
    # acc_ref: (Cout, tm) f32 scratch, resident across the Cin-reduction axis.
    k = pl.program_id(2)

    @pl.when(k == 0)
    def _init():
        acc_ref[...] = jnp.zeros_like(acc_ref)

    acc_ref[...] += jnp.dot(w_ref[...], x_ref[...],
                            preferred_element_type=jnp.float32)

    @pl.when(k == pl.num_programs(2) - 1)
    def _finalize():
        # Bias add only once per output tile (not per reduction step).
        o_ref[...] = (acc_ref[...] + b_ref[...]).astype(o_ref.dtype)


def _physical_vmem_bytes():
    """Per-core VMEM capacity; conservative (v7x-sized) fallback if the query
    fails, which is safe on every generation."""
    try:
        return int(pltpu.get_tpu_info().vmem_capacity_bytes)
    except Exception:
        return 64 << 20


def _pick_cin_tile(cin):
    """Keep all of Cin resident unless it is large. A split tile must be a
    multiple of 128 (lane-dim layout rule for the weight block) AND divide Cin
    exactly, so the reduction never consumes an unmasked ragged K tail."""
    if cin <= 2048:
        return cin
    for cand in (2048, 1024, 512, 256, 128):
        if cin % cand == 0:
            return cand
    return cin  # no clean split: keep resident; vmem_limit is raised below


def _pick_spatial_tile(hw, tk, cout, itemsize, budget_bytes, tm_cap=32768):
    """Largest spatial tile (multiple of 128, or the full HW extent) whose
    double-buffered input/output tiles + f32 accumulator + double-buffered
    weight/bias fit the generation-aware VMEM budget."""
    per_tm = (2 * tk + 2 * cout) * itemsize + cout * 4     # bytes / spatial col
    fixed = 2 * cout * tk * itemsize + 2 * cout * 4        # weight + bias (2x)
    avail = max(budget_bytes - fixed, 128 * per_tm)
    tm = min(tm_cap, avail // per_tm)
    tm = max(128, (tm // 128) * 128)
    if hw <= tm:
        return hw   # full spatial extent fits the budget -> one dense block
    return tm


def _cap_for_multicore(tm, hw, n, min_steps=4):
    """Keep >= min_steps grid steps so v7x's two TensorCores both get work.
    Only triggers when total work is tiny, so the added per-step overhead on
    single-core chips is negligible."""
    n_sp = -(-hw // tm)
    if n * n_sp >= min_steps or hw < 2 * 128:
        return tm
    want_sp = -(-min_steps // max(n, 1))
    cand = (hw // want_sp) // 128 * 128
    if cand >= 128:
        return min(tm, cand)
    return tm


def out_conv(x_nchw, weight, bias):
    """1x1 Conv2d forward. x_nchw: (N, Cin, H, W); weight: (Cout, Cin, 1, 1);
    bias: (Cout,). Returns (N, Cout, H, W) — matches PyTorch nn.Conv2d(k=1)."""
    n, cin, h, w = x_nchw.shape
    cout = weight.shape[0]
    hw = h * w
    itemsize = jnp.dtype(x_nchw.dtype).itemsize

    # Free reshapes only — no transposes, no padding copies.
    x3 = x_nchw.reshape(n, cin, hw)                      # (N, Cin, HW)
    w_mat = weight.reshape(cout, cin).astype(x_nchw.dtype)  # (Cout, Cin)
    b_col = bias.reshape(cout, 1).astype(jnp.float32)       # (Cout, 1)

    # Generation-aware sizing: ~40% of physical VMEM for the pipelined buffers.
    phys_vmem = _physical_vmem_bytes()
    budget = int(phys_vmem * 0.40)

    tk = _pick_cin_tile(cin)
    n_k = -(-cin // tk)
    tm = _pick_spatial_tile(hw, tk, cout, itemsize, budget)
    tm = _cap_for_multicore(tm, hw, n)
    n_spatial = -(-hw // tm)
    grid = (n, n_spatial, n_k)

    # VMEM accounting: Pallas double-buffers every input/output block (even the
    # resident weight/bias). Used to set an explicit scoped limit that never
    # exceeds ~85% of physical VMEM (v7x is only 64 MiB).
    vmem_est = (2 * tk * tm * itemsize          # x double buffer
                + 2 * cout * tm * itemsize      # out double buffer
                + cout * tm * 4                 # f32 accumulator scratch
                + 2 * cout * tk * itemsize      # weight double buffer
                + 2 * cout * 4)                 # bias double buffer
    vmem_limit = int(min(max(vmem_est + (8 << 20), 32 << 20),
                         int(phys_vmem * 0.85)))

    cost = pl.CostEstimate(
        flops=2 * n * hw * cin * cout,
        transcendentals=0,
        bytes_accessed=(x3.size * itemsize + w_mat.size * itemsize
                        + b_col.size * 4 + n * cout * hw * itemsize),
    )

    # Note: for "fat" 1x1 convs (Cout in the thousands) a Cout grid axis would
    # also be needed to keep the weight block small; OutConv has tiny Cout.
    out3 = pl.pallas_call(
        _outconv_kernel,
        out_shape=jax.ShapeDtypeStruct((n, cout, hw), x_nchw.dtype),
        grid_spec=pltpu.PrefetchScalarGridSpec(
            num_scalar_prefetch=0,
            grid=grid,
            in_specs=[
                pl.BlockSpec((cout, tk), lambda ni, ji, ki: (0, ki)),   # weight
                pl.BlockSpec((cout, 1), lambda ni, ji, ki: (0, 0)),     # bias
                pl.BlockSpec((pl.Squeezed(), tk, tm),
                             lambda ni, ji, ki: (ni, ki, ji)),          # x
            ],
            out_specs=pl.BlockSpec((pl.Squeezed(), cout, tm),
                                   lambda ni, ji, ki: (ni, 0, ji)),
            scratch_shapes=[pltpu.VMEM((cout, tm), jnp.float32)],
        ),
        compiler_params=pltpu.CompilerParams(
            dimension_semantics=("parallel", "parallel", "arbitrary"),
            vmem_limit_bytes=vmem_limit,
        ),
        cost_estimate=cost,
    )(w_mat, b_col, x3)

    return out3.reshape(n, cout, h, w)


if __name__ == "__main__":
    key = jax.random.PRNGKey(0)
    k_x, k_w, k_b = jax.random.split(key, 3)

    N, CIN, COUT, H, W = 2, 4, 3, 16, 16

    x = jax.random.normal(k_x, (N, CIN, H, W), dtype=jnp.float32)
    # deterministic synthetic params matching nn.Conv2d(in, out, kernel_size=1)
    weight = jax.random.normal(k_w, (COUT, CIN, 1, 1), dtype=jnp.float32) * 0.1
    bias = jax.random.normal(k_b, (COUT,), dtype=jnp.float32) * 0.1

    y = jax.block_until_ready(out_conv(x, weight, bias))

    # reference check in plain JAX
    y_ref = jnp.einsum("nchw,oc->nohw", x, weight.reshape(COUT, CIN)) + \
        bias.reshape(1, COUT, 1, 1)
    assert y.shape == (N, COUT, H, W)
    assert jnp.allclose(y, y_ref, atol=1e-5, rtol=1e-5)

    print("KERNEL_OK")
</pallas_src>

<mosaic_0001>
module attributes {stable_mosaic.version = 11 : i64} {
  func.func @_outconv_kernel(%arg0: i32, %arg1: i32, %arg2: i32, %arg3: memref<3x4xf32, #tpu.memory_space<vmem>>, %arg4: memref<3x1xf32, #tpu.memory_space<vmem>>, %arg5: memref<1x4x128xf32, #tpu.memory_space<vmem>>, %arg6: memref<1x3x128xf32, #tpu.memory_space<vmem>>, %arg7: memref<3x128xf32, #tpu.memory_space<vmem>>) attributes {dimension_semantics = [#tpu.dimension_semantics<parallel>, #tpu.dimension_semantics<parallel>, #tpu.dimension_semantics<arbitrary>], iteration_bounds = array<i64: 2, 2, 1>, scalar_prefetch = 0 : i64, scratch_operands = 1 : i64, tpu.core_type = #tpu.core_type<tc>, window_params = [{transform_indices = @transform_0, window_bounds = array<i64: 3, 4>}, {pipeline_mode = #tpu.pipeline_mode<synchronous>, transform_indices = @transform_1, window_bounds = array<i64: 3, 1>}, {transform_indices = @transform_2, window_bounds = array<i64: 1, 4, 128>}, {transform_indices = @transform_3, window_bounds = array<i64: 1, 3, 128>}]} {
    %c0_i32 = arith.constant 0 : i32
    %0 = arith.cmpi eq, %arg2, %c0_i32 : i32
    %1 = arith.extui %0 : i1 to i32
    %c0_i32_0 = arith.constant 0 : i32
    %2 = arith.cmpi ne, %1, %c0_i32_0 : i32
    scf.if %2 {
      %cst_11 = arith.constant 0.000000e+00 : f32
      %13 = vector.broadcast %cst_11 : f32 to vector<3x128xf32>
      %c0_12 = arith.constant 0 : index
      %c0_13 = arith.constant 0 : index
      %14 = vector.load %arg7[%c0_12, %c0_13] : memref<3x128xf32, #tpu.memory_space<vmem>>, vector<3x128xf32>
      tpu.vector_store %arg7[%c0_12, %c0_13], %13 {strides = array<i32>} : memref<3x128xf32, #tpu.memory_space<vmem>>, vector<3x128xf32>,
    } else {
    }
    %c0 = arith.constant 0 : index
    %c0_1 = arith.constant 0 : index
    %3 = vector.load %arg7[%c0, %c0_1] : memref<3x128xf32, #tpu.memory_space<vmem>>, vector<3x128xf32>
    %c0_2 = arith.constant 0 : index
    %c0_3 = arith.constant 0 : index
    %4 = vector.load %arg3[%c0_2, %c0_3] : memref<3x4xf32, #tpu.memory_space<vmem>>, vector<3x4xf32>
    %c0_4 = arith.constant 0 : index
    %c0_5 = arith.constant 0 : index
    %c0_6 = arith.constant 0 : index
    %5 = vector.load %arg5[%c0_4, %c0_5, %c0_6] : memref<1x4x128xf32, #tpu.memory_space<vmem>>, vector<1x4x128xf32>
    %6 = vector.shape_cast %5 : vector<1x4x128xf32> to vector<4x128xf32>
    %cst = arith.constant dense<0.000000e+00> : vector<3x128xf32>
    %7 = tpu.matmul %4, %6, %cst {dimension_numbers = #tpu.dot_dimension_numbers<[1], [0], [0], [1], [0, 0, 1, 1], [], []>} : vector<3x4xf32>, vector<4x128xf32>, vector<3x128xf32> -> vector<3x128xf32>
    %8 = arith.addf %3, %7 : vector<3x128xf32>
    %c0_7 = arith.constant 0 : index
    %c0_8 = arith.constant 0 : index
    %9 = vector.load %arg7[%c0_7, %c0_8] : memref<3x128xf32, #tpu.memory_space<vmem>>, vector<3x128xf32>
    tpu.vector_store %arg7[%c0_7, %c0_8], %8 {strides = array<i32>} : memref<3x128xf32, #tpu.memory_space<vmem>>, vector<3x128xf32>,
    %c0_i32_9 = arith.constant 0 : i32
    %10 = arith.cmpi eq, %arg2, %c0_i32_9 : i32
    %11 = arith.extui %10 : i1 to i32
    %c0_i32_10 = arith.constant 0 : i32
    %12 = arith.cmpi ne, %11, %c0_i32_10 : i32
    scf.if %12 {
      %c0_11 = arith.constant 0 : index
      %c0_12 = arith.constant 0 : index
      %13 = vector.load %arg7[%c0_11, %c0_12] : memref<3x128xf32, #tpu.memory_space<vmem>>, vector<3x128xf32>
      %c0_13 = arith.constant 0 : index
      %c0_14 = arith.constant 0 : index
      %14 = vector.load %arg4[%c0_13, %c0_14] : memref<3x1xf32, #tpu.memory_space<vmem>>, vector<3x1xf32>
      %15 = vector.broadcast %14 : vector<3x1xf32> to vector<3x128xf32>
      %16 = arith.addf %13, %15 : vector<3x128xf32>
      %c0_15 = arith.constant 0 : index
      %c0_16 = arith.constant 0 : index
      %c0_17 = arith.constant 0 : index
      %17 = vector.load %arg6[%c0_15, %c0_16, %c0_17] : memref<1x3x128xf32, #tpu.memory_space<vmem>>, vector<1x3x128xf32>
      %18 = vector.shape_cast %17 : vector<1x3x128xf32> to vector<3x128xf32>
      %19 = vector.shape_cast %16 : vector<3x128xf32> to vector<1x3x128xf32>
      tpu.vector_store %arg6[%c0_15, %c0_16, %c0_17], %19 {strides = array<i32>} : memref<1x3x128xf32, #tpu.memory_space<vmem>>, vector<1x3x128xf32>,
    } else {
    }
    return
  }
  func.func @transform_0(%arg0: i32, %arg1: i32, %arg2: i32) -> (i32, i32) {
    %c0_i32 = arith.constant 0 : i32
    %c0_i32_0 = arith.constant 0 : i32
    return %c0_i32, %arg2 : i32, i32
  }
  func.func @transform_1(%arg0: i32, %arg1: i32, %arg2: i32) -> (i32, i32) {
    %c0_i32 = arith.constant 0 : i32
    %c0_i32_0 = arith.constant 0 : i32
    %c0_i32_1 = arith.constant 0 : i32
    return %c0_i32, %c0_i32_0 : i32, i32
  }
  func.func @transform_2(%arg0: i32, %arg1: i32, %arg2: i32) -> (i32, i32, i32) {
    %c0_i32 = arith.constant 0 : i32
    return %arg0, %arg2, %arg1 : i32, i32, i32
  }
  func.func @transform_3(%arg0: i32, %arg1: i32, %arg2: i32) -> (i32, i32, i32) {
    %c0_i32 = arith.constant 0 : i32
    %c0_i32_0 = arith.constant 0 : i32
    return %arg0, %c0_i32, %arg1 : i32, i32, i32
  }
}

</mosaic_0001>

<llo_original>
// kernel: tpu_custom_call.1
$region0: #{tpu_custom_call.1}
  #allocation0 [shape = 'u32[]', space=smem, size = 0x4, offset = 0x4, fixed_abs, tag = 'smem constant byte address 0x4 - core index']
  #allocation1 [shape = 'u32[144,128]{1,0:T(1,128)}', space=vmem, size = 0x12000, scoped, tag = 'internal scratch']
  #allocation2 [shape = 'f32[3,128]{1,0:T(4,128)}', space=vmem, size = 0x800, scoped, tag = 'scratch operand']
  %s0 = inlined_call_operand.vmem [shape: f32[3,4], index: 0, kind: input, shape index: {}]
  %s1 = inlined_call_operand.vmem [shape: f32[3,1], index: 1, kind: input, shape index: {}]
  %s2 = inlined_call_operand.hbm [shape: f32[2,4,256], index: 2, kind: input, shape index: {}]
  %s3 = inlined_call_operand.vmem [shape: f32[2,3,256], index: 3, kind: output, shape index: {}]
  %s4 = sld [smem:[#allocation0]]
  $region57: #{tpu_custom_call.1} parent=0
    _
  %s6 = ssub.s32 1, %s4
  %s7 = scalar_select 0, %s6, %s4
  $region1: #{tpu_custom_call.1} parent=0
    #allocation3 [shape = 'u8[4096]{0}', space=vmem, size = 0x1000, scoped, tag = 'input window, operand 2']
    #allocation4 [shape = 's32[2]{0}', space=sflag, size = 0x8, scoped, tag = 'scoped memory for tpu_custom_call.1']
    %8 = vsyncpa [#allocation4], 0
    %s9 = scalar_lea.sflag [#allocation4], 1
    %10 = vsyncpa %s9, 0
    loop: start=0, step=1, limit=6
    $region2: #{tpu_custom_call.1} parent=1 // loop_pre_header
      _
    $region3: #{tpu_custom_call.1} parent=1 // loop_header
      %s12 = sphi 0, %s16
      %p13 = scmp.ge.s32.totalorder %s12, 6
      %s19 = sphi 0, %s38
      %s20 = sphi 0, %s34
      %s21 = sphi 0, %s30
      %s22 = sphi 0, %s19
      %s23 = sphi 0, %s20
      %s24 = sphi 0, %s21
      %s25 = sphi 0, %s22
      %s26 = sphi 0, %s23
      %s27 = sphi 0, %s24
      %s41 = sphi 0, %s43
      %s44 = sphi 0, %s41
      %s45 = sphi 0, %s44
      %s61 = sphi 0, %s45
      %s65 = sphi 0, %s65
      %s67 = sphi 0, %s65
      %s68 = sphi 0, %s67
      %s82 = sphi 0, %s68
      %s92 = sphi 0, %s94
      %s95 = sphi 0, %s92
      %s96 = sphi 0, %s95
      %s112 = sphi 0, %s96
      %s120 = sphi 0, %s122
      %s123 = sphi 0, %s120
      %s124 = sphi 0, %s123
      %s140 = sphi 0, %s124
    $region4: #{tpu_custom_call.1} parent=1 // loop_header_branch
      %15 = sbr.rel (%p13) target = $region8
    $region5: #{tpu_custom_call.1} parent=1 // loop_body
      %s17 = ssub.s32 %s12, 1
      %s18 = ssub.s32 %s12, 2
      %s28 = sadd.s32 1, %s21
      %p29 = scmp.ge.s32.totalorder %s28, 1
      %s30 = scalar_select %p29, 0, %s28
      %s31 = sadd.s32 1, %s20
      %s32 = scalar_select %p29, %s31, %s20
      %p33 = scmp.ge.s32.totalorder %s32, 2
      %s34 = scalar_select %p33, 0, %s32
      %s35 = sadd.s32 1, %s19
      %s36 = scalar_select %p33, %s35, %s19
      %p37 = scmp.ge.s32.totalorder %s36, 2
      %s38 = scalar_select %p37, 0, %s36
      %s39 = ssub.s32 %s21, %s30
      %p40 = scmp.eq.s32.totalorder %s39, 0
      %s42 = sadd.s32 %s41, 1
      %s43 = scalar_select %p40, %s41, %s42
      %p46 = pneg %p40
      %p47 = scmp.eq.s32.totalorder %s12, 3
      %p48 = por %p46, %p47
      %p49 = scmp.ne.s32.totalorder %s41, %s44
      %p50 = scmp.eq.s32.totalorder %s12, 0
      %p51 = por %p49, %p50
      %p52 = scmp.ne.s32.totalorder %s41, %s44
      %p53 = scmp.eq.s32.totalorder %s17, 3
      %p54 = por %p52, %p53
      %p55 = scmp.ne.s32.totalorder %s44, %s45
      %p56 = scmp.eq.s32.totalorder %s17, 0
      %p57 = por %p55, %p56
      %p58 = scmp.ne.s32.totalorder %s44, %s45
      %p59 = scmp.eq.s32.totalorder %s18, 3
      %p60 = por %p58, %p59
      %p62 = scmp.ne.s32.totalorder %s45, %s61
      %p63 = scmp.eq.s32.totalorder %s18, 0
      %p64 = por %p62, %p63
      %s66 = sadd.s32 %s65, 1
      %p69 = scmp.eq.s32.totalorder %s12, 3
      %p70 = scmp.ne.s32.totalorder %s65, %s67
      %p71 = scmp.eq.s32.totalorder %s12, 0
      %p72 = por %p70, %p71
      %p73 = scmp.ne.s32.totalorder %s65, %s67
      %p74 = scmp.eq.s32.totalorder %s17, 3
      %p75 = por %p73, %p74
      %p76 = scmp.ne.s32.totalorder %s67, %s68
      %p77 = scmp.eq.s32.totalorder %s17, 0
      %p78 = por %p76, %p77
      %p79 = scmp.ne.s32.totalorder %s67, %s68
      %p80 = scmp.eq.s32.totalorder %s18, 3
      %p81 = por %p79, %p80
      %p83 = scmp.ne.s32.totalorder %s68, %s82
      %p84 = scmp.eq.s32.totalorder %s18, 0
      %p85 = por %p83, %p84
      %s86 = ssub.s32 %s19, %s38
      %s87 = ssub.s32 %s21, %s30
      %s88 = sor.u32 %s86, %s87
      %s89 = ssub.s32 %s20, %s34
      %s90 = sor.u32 %s88, %s89
      %p91 = scmp.eq.s32.totalorder %s90, 0
      %s93 = sadd.s32 %s92, 1
      %s94 = scalar_select %p91, %s92, %s93
      %p97 = pneg %p91
      %p98 = scmp.eq.s32.totalorder %s12, 3
      %p99 = por %p97, %p98
      %p100 = scmp.ne.s32.totalorder %s92, %s95
      %p101 = scmp.eq.s32.totalorder %s12, 0
      %p102 = por %p100, %p101
      %p103 = scmp.ne.s32.totalorder %s92, %s95
      %p104 = scmp.eq.s32.totalorder %s17, 3
      %p105 = por %p103, %p104
      %p106 = scmp.ne.s32.totalorder %s95, %s96
      %p107 = scmp.eq.s32.totalorder %s17, 0
      %p108 = por %p106, %p107
      %p109 = scmp.ne.s32.totalorder %s95, %s96
      %p110 = scmp.eq.s32.totalorder %s18, 3
      %p111 = por %p109, %p110
      %p113 = scmp.ne.s32.totalorder %s96, %s112
      %p114 = scmp.eq.s32.totalorder %s18, 0
      %p115 = por %p113, %p114
      %s116 = ssub.s32 %s19, %s38
      %s117 = ssub.s32 %s20, %s34
      %s118 = sor.u32 %s116, %s117
      %p119 = scmp.eq.s32.totalorder %s118, 0
      %s121 = sadd.s32 %s120, 1
      %s122 = scalar_select %p119, %s120, %s121
      %p125 = pneg %p119
      %p126 = scmp.eq.s32.totalorder %s12, 3
      %p127 = por %p125, %p126
      %p128 = scmp.ne.s32.totalorder %s120, %s123
      %p129 = scmp.eq.s32.totalorder %s12, 0
      %p130 = por %p128, %p129
      %p131 = scmp.ne.s32.totalorder %s120, %s123
      %p132 = scmp.eq.s32.totalorder %s17, 3
      %p133 = por %p131, %p132
      %p134 = scmp.ne.s32.totalorder %s123, %s124
      %p135 = scmp.eq.s32.totalorder %s17, 0
      %p136 = por %p134, %p135
      %p137 = scmp.ne.s32.totalorder %s123, %s124
      %p138 = scmp.eq.s32.totalorder %s18, 3
      %p139 = por %p137, %p138
      %p141 = scmp.ne.s32.totalorder %s124, %s140
      %p142 = scmp.eq.s32.totalorder %s18, 0
      %p143 = por %p141, %p142
      %p144 = scmp.le.s32.totalorder 1, %s12
      %p145 = scmp.lt.s32.totalorder %s12, 5
      %p146 = pnand %p144, %p145
      %p147 = pneg %p146
      // Predicated region
      $region9: #{tpu_custom_call.1} parent=5 // pred_check
        _
      $region10: #{tpu_custom_call.1} parent=5 // pred_check_branch
        %149 = sbr.rel (%p146) target = $region12
      $region11: #{tpu_custom_call.1} parent=5 // pred_region
        %s150 = ssub.s32 %s12, 1
        // Predicated region
        $region13: #{tpu_custom_call.1} parent=11 // pred_check
          %p151 = pneg %p57
        $region14: #{tpu_custom_call.1} parent=11 // pred_check_branch
          %153 = sbr.rel (%p151) target = $region16
        $region15: #{tpu_custom_call.1} parent=11 // pred_region
          %p154 = scmp.lt.s32.totalorder %s24, 0
          %s155 = scalar_select %p154, %s24, 0
          %s156 = smul.addr %s155, 4
          %s157 = scalar_lea.vmem %s0, %s156
        $region16: #{tpu_custom_call.1} parent=11 // pred_fallthru
          _
        // Predicated region
        $region17: #{tpu_custom_call.1} parent=11 // pred_check
          %p158 = pneg %p78
        $region18: #{tpu_custom_call.1} parent=11 // pred_check_branch
          %160 = sbr.rel (%p158) target = $region20
        $region19: #{tpu_custom_call.1} parent=11 // pred_region
          _
        $region20: #{tpu_custom_call.1} parent=11 // pred_fallthru
          _
      $region12: #{tpu_custom_call.1} parent=5 // pred_fallthru
        _
      %p161 = scmp.lt.s32.totalorder %s12, 4
      // Predicated region
      $region21: #{tpu_custom_call.1} parent=5 // pred_check
        %p162 = pneg %p161
      $region22: #{tpu_custom_call.1} parent=5 // pred_check_branch
        %164 = sbr.rel (%p162) target = $region24
      $region23: #{tpu_custom_call.1} parent=5 // pred_region
        // Predicated region
        $region25: #{tpu_custom_call.1} parent=23 // pred_check
          %p165 = pneg %p102
        $region26: #{tpu_custom_call.1} parent=23 // pred_check_branch
          %167 = sbr.rel (%p165) target = $region28
        $region27: #{tpu_custom_call.1} parent=23 // pred_region
          %s168 = sand.u32 %s92, 1
          %s169 = scalar_lea.sflag [#allocation4], %s168
          %s170 = sand.u32 %s92, 1
          %s171 = smul.addr %s170, 4
          %s172 = scalar_lea.vmem [#allocation3], %s171
          %s174 = ssub.s32 64, 64
          %175 = vsyncadd %s169, %s174
          %s176 = smul.addr %s21, 2
          %s177 = sadd.s32 %s20, %s176
          %s178 = smul.addr %s19, 2
          %s179 = sadd.s32 %s177, %s178
          %s180 = smul.addr %s179, 64
          %s181 = scalar_lea.hbm %s2, %s180
          %s183 = sshll.u32 %s172, 4
          %s184 = int_to_ptr.vmem [resolvable:$true] %s183
          %186 = dma.hbm_to_vmem [thread:$0]  %s181, 64, %s184, %s169
        $region28: #{tpu_custom_call.1} parent=23 // pred_fallthru
          _
      $region24: #{tpu_custom_call.1} parent=5 // pred_fallthru
        _
      %p187 = scmp.le.s32.totalorder 1, %s12
      %p188 = scmp.lt.s32.totalorder %s12, 5
      %p189 = pnand %p187, %p188
      %p190 = pneg %p189
      // Predicated region
      $region29: #{tpu_custom_call.1} parent=5 // pred_check
        _
      $region30: #{tpu_custom_call.1} parent=5 // pred_check_branch
        %192 = sbr.rel (%p189) target = $region32
      $region31: #{tpu_custom_call.1} parent=5 // pred_region
        %s193 = ssub.s32 %s12, 1
        %s194 = sand.u32 %s95, 1
        %s195 = scalar_lea.sflag [#allocation4], %s194
        %s196 = sand.u32 %s95, 1
        %s197 = smul.addr %s196, 4
        %s198 = scalar_lea.vmem [#allocation3], %s197
        // Predicated region
        $region33: #{tpu_custom_call.1} parent=31 // pred_check
          %p199 = pneg %p108
        $region34: #{tpu_custom_call.1} parent=31 // pred_check_branch
          %201 = sbr.rel (%p199) target = $region36
        $region35: #{tpu_custom_call.1} parent=31 // pred_region
          %202 = dma.done %s195, 64
        $region36: #{tpu_custom_call.1} parent=31 // pred_fallthru
          _
        %p203 = scmp.lt.s32.totalorder %s24, 0
        %s204 = scalar_select %p203, %s24, 0
        %s205 = smul.addr %s204, 4
        %s206 = scalar_lea.vmem %s0, %s205
        %p207 = pneg %p57
        %p208 = pneg %p54
        %p209 = pneg %p78
        %p210 = pneg %p75
        %s211 = sand.u32 %s95, 1
        %s212 = scalar_lea.sflag [#allocation4], %s211
        %s213 = sand.u32 %s95, 1
        %s214 = smul.addr %s213, 4
        %s215 = scalar_lea.vmem [#allocation3], %s214
        %p216 = pneg %p108
        %p217 = pneg %p105
        %p218 = pneg %p136
        %p219 = pneg %p133
        %p220 = scmp.lt.s32.totalorder %s22, 1
        %s221 = scalar_select %p220, %s22, 1
        %p222 = scmp.lt.s32.totalorder %s23, 1
        %s223 = scalar_select %p222, %s23, 1
        %s224 = smul.addr %s221, 2
        %s225 = sadd.s32 %s223, %s224
        %s226 = smul.addr %s225, 4
        %s227 = scalar_lea.vmem %s3, %s226
        %p228 = scmp.lt.s32.totalorder %s24, 0
        %s229 = scalar_select %p228, %s24, 0
        %s230 = smul.addr %s229, 4
        %s231 = scalar_lea.vmem %s0, %s230
        %p232 = scmp.lt.s32.totalorder %s22, 1
        %s233 = scalar_select %p232, %s22, 1
        %p234 = scmp.lt.s32.totalorder %s23, 1
        %s235 = scalar_select %p234, %s23, 1
        %s236 = smul.addr %s233, 2
        %s237 = sadd.s32 %s235, %s236
        %s238 = smul.addr %s237, 4
        %s239 = scalar_lea.vmem %s3, %s238
        %p240 = scmp.eq.s32.totalorder %s24, 0
        // Predicated region
        $region37: #{tpu_custom_call.1} parent=31 // pred_check
          %p241 = pneg %p240
        $region38: #{tpu_custom_call.1} parent=31 // pred_check_branch
          %243 = sbr.rel (%p241) target = $region40
        $region39: #{tpu_custom_call.1} parent=31 // pred_region
          %244 = vst [vmem:[#allocation2] sm:$0x7] 0.0
        $region40: #{tpu_custom_call.1} parent=31 // pred_fallthru
          _
        %v245 = vld [vmem:[#allocation2] sm:$0x7]
        %v246 = vld [vmem:[%s231] sm:$0x7]
        %v247 = vld [vmem:[%s198] sm:$0xf]
        %vm248 = vcmask 31744
        %v250 = vsel %vm248, %v246, 0
        %vm252 = vcmask 1043456
        %v254 = vsel %vm252, %v247, 0
        %256 = vmatprep.subr.mxu0 0.0
        %257 = vmatpush1.msra.mxu0 %v254
        %258 = vmatprep.subr.mxu0 0.0
        %259 = vmatpush1.msra.mxu0 0.0
        %260 = vmatprep.subr.mxu0 0.0
        %261 = vmatpush1.msra.mxu0 0.0
        %262 = vmatprep.subr.mxu0 0.0
        %263 = vmatpush1.msra.mxu0 0.0
        %264 = vmatprep.subr.mxu0 0.0
        %265 = vmatpush1.msra.mxu0 0.0
        %266 = vmatprep.subr.mxu0 0.0
        %267 = vmatpush1.msra.mxu0 0.0
        %268 = vmatprep.subr.mxu0 0.0
        %269 = vmatpush1.msra.mxu0 0.0
        %270 = vmatprep.subr.mxu0 0.0
        %271 = vmatpush1.msra.mxu0 0.0
        %272 = vmatprep.subr.mxu0 0.0
        %273 = vmatpush1.msra.mxu0 0.0
        %274 = vmatprep.subr.mxu0 0.0
        %275 = vmatpush1.msra.mxu0 0.0
        %276 = vmatprep.subr.mxu0 0.0
        %277 = vmatpush1.msra.mxu0 0.0
        %278 = vmatprep.subr.mxu0 0.0
        %279 = vmatpush1.msra.mxu0 0.0
        %280 = vmatprep.subr.mxu0 0.0
        %281 = vmatpush1.msra.mxu0 0.0
        %282 = vmatprep.subr.mxu0 0.0
        %283 = vmatpush1.msra.mxu0 0.0
        %284 = vmatprep.subr.mxu0 0.0
        %285 = vmatpush1.msra.mxu0 0.0
        %286 = vmatprep.subr.mxu0 0.0
        %287 = vmatpush1.msra.mxu0 0.0
        %288 = vmatprep.subr.mxu0 0.0
        %289 = vmatpush1.msra.mxu0 0.0
        %290 = vmatprep.subr.mxu0 0.0
        %291 = vmatpush1.msra.mxu0 0.0
        %292 = vmatprep.subr.mxu0 0.0
        %293 = vmatpush1.msra.mxu0 0.0
        %294 = vmatprep.subr.mxu0 0.0
        %295 = vmatpush1.msra.mxu0 0.0
        %296 = vmatprep.subr.mxu0 0.0
        %297 = vmatpush1.msra.mxu0 0.0
        %298 = vmatprep.subr.mxu0 0.0
        %299 = vmatpush1.msra.mxu0 0.0
        %300 = vmatprep.subr.mxu0 0.0
        %301 = vmatpush1.msra.mxu0 0.0
        %302 = vmatprep.subr.mxu0 0.0
        %303 = vmatpush1.msra.mxu0 0.0
        %304 = vmatprep.subr.mxu0 0.0
        %305 = vmatpush1.msra.mxu0 0.0
        %306 = vmatprep.subr.mxu0 0.0
        %307 = vmatpush1.msra.mxu0 0.0
        %308 = vmatprep.subr.mxu0 0.0
        %309 = vmatpush1.msra.mxu0 0.0
        %310 = vmatprep.subr.mxu0 0.0
        %311 = vmatpush1.msra.mxu0 0.0
        %312 = vmatprep.subr.mxu0 0.0
        %313 = vmatpush1.msra.mxu0 0.0
        %314 = vmatprep.subr.mxu0 0.0
        %315 = vmatpush1.msra.mxu0 0.0
        %316 = vmatprep.subr.mxu0 0.0
        %317 = vmatpush1.msra.mxu0 0.0
        %318 = vmatprep.subr.mxu0 0.0
        %319 = vmatpush1.msra.mxu0 0.0
        %320 = vmatprep.mubr.f32.mxu0 0.0
        %321 = vmatmul.mubr.f32.gmra.mrb[0].mxu0 %v250
        %v322 = vpop.f32.mrb[0].mxu0
        %v323 = vadd.f32 0.0, %v322
        %v324 = vpop.f32.mrb[0].mxu0
        %325 = vdwg.mxu0
        %v326 = vadd.f32 %v245, %v323
        %327 = vst [vmem:[#allocation2] sm:$0x7] %v326
        // Predicated region
        $region41: #{tpu_custom_call.1} parent=31 // pred_check
          %p328 = pneg %p240
        $region42: #{tpu_custom_call.1} parent=31 // pred_check_branch
          %330 = sbr.rel (%p328) target = $region44
        $region43: #{tpu_custom_call.1} parent=31 // pred_region
          %v331 = vld [vmem:[#allocation2] sm:$0x7]
          %v332 = vld [vmem:[%s1] sm:$0x7]
          %334 = vset.pattern.permute.xlu0 0
          %335 = vperm.xlu0 %334, %v332
          %v336 = vpop.permute.xlu0 %335
          %v338 = vadd.f32 %v331, %v336
          %339 = vst [vmem:[%s239] sm:$0x7] %v338
        $region44: #{tpu_custom_call.1} parent=31 // pred_fallthru
          _
        %p340 = scmp.lt.s32.totalorder %s22, 1
        %s341 = scalar_select %p340, %s22, 1
        %p342 = scmp.lt.s32.totalorder %s23, 1
        %s343 = scalar_select %p342, %s23, 1
        %s344 = smul.addr %s341, 2
        %s345 = sadd.s32 %s343, %s344
        %s346 = smul.addr %s345, 4
        %s347 = scalar_lea.vmem %s3, %s346
        // Predicated region
        $region45: #{tpu_custom_call.1} parent=31 // pred_check
          %p348 = pneg %p133
        $region46: #{tpu_custom_call.1} parent=31 // pred_check_branch
          %350 = sbr.rel (%p348) target = $region48
        $region47: #{tpu_custom_call.1} parent=31 // pred_region
          _
        $region48: #{tpu_custom_call.1} parent=31 // pred_fallthru
          _
      $region32: #{tpu_custom_call.1} parent=5 // pred_fallthru
        _
      %p351 = scmp.le.s32.totalorder 2, %s12
      // Predicated region
      $region49: #{tpu_custom_call.1} parent=5 // pred_check
        %p352 = pneg %p351
      $region50: #{tpu_custom_call.1} parent=5 // pred_check_branch
        %354 = sbr.rel (%p352) target = $region52
      $region51: #{tpu_custom_call.1} parent=5 // pred_region
        %s355 = ssub.s32 %s12, 2
        // Predicated region
        $region53: #{tpu_custom_call.1} parent=51 // pred_check
          %p356 = pneg %p139
        $region54: #{tpu_custom_call.1} parent=51 // pred_check_branch
          %358 = sbr.rel (%p356) target = $region56
        $region55: #{tpu_custom_call.1} parent=51 // pred_region
          %p359 = scmp.lt.s32.totalorder %s25, 1
          %s360 = scalar_select %p359, %s25, 1
          %p361 = scmp.lt.s32.totalorder %s26, 1
          %s362 = scalar_select %p361, %s26, 1
          %s363 = smul.addr %s360, 2
          %s364 = sadd.s32 %s362, %s363
          %s365 = smul.addr %s364, 4
          %s366 = scalar_lea.vmem %s3, %s365
        $region56: #{tpu_custom_call.1} parent=51 // pred_fallthru
          _
      $region52: #{tpu_custom_call.1} parent=5 // pred_fallthru
        _
    $region6: #{tpu_custom_call.1} parent=1 // loop_footer
      %s16 = sadd.s32 1, %s12
    $region7: #{tpu_custom_call.1} parent=1 // loop_footer_branch
      %11 = sbr.rel target = $region3
    $region8: #{tpu_custom_call.1} parent=1 // loop_exit
      _
    %367 = vsyncpa [#allocation4], 1
    %s368 = scalar_lea.sflag [#allocation4], 1
    %369 = vsyncpa %s368, 1

</llo_original>
